<compile_context>
chip_gen: v7x
topology: tpu7x:2x2x1
jax: 0.10.0
libtpu: 0.0.40
codegen_flags: <defaults>
</compile_context>

<pallas_src>
import numpy as np
import jax
import jax.numpy as jnp
from jax.experimental import pallas as pl
from jax.experimental.pallas import tpu as pltpu


def _make_kernel(h, w, hwp):
    """Build the kernel for static image height/width and padded lane width."""

    def kernel(mw_ref, mh_ref, x_ref, out_ref):
        gg = pl.program_id(1)  # serial accumulation axis

        @pl.when(gg == 0)
        def _init():
            out_ref[...] = jnp.zeros_like(out_ref)

        xx = x_ref[...].astype(jnp.float32)          # (R, HWP), cast in-kernel
        partial = jnp.zeros((), dtype=jnp.float32)

        if w > 1:
            # horizontal diffs: pairs (i, i+1) within an image row
            mw = mw_ref[...]                         # (1, HWP) 0/1 mask
            d = (xx[:, : hwp - 1] - xx[:, 1:]) * mw[:, : hwp - 1]
            partial = partial + jnp.sum(d * d)

        if h > 1:
            # vertical diffs: pairs (i, i+w) within an image
            mh = mh_ref[...]                         # (1, HWP) 0/1 mask
            d = (xx[:, : hwp - w] - xx[:, w:]) * mh[:, : hwp - w]
            partial = partial + jnp.sum(d * d)

        # broadcast-add into the resident per-core accumulator block
        out_ref[...] += partial

    return kernel


def self_smooth_loss2(x: jax.Array, weight: float = 1.0) -> jax.Array:
    """x: (N, C, H, W). Returns shape-(1,) float32 smoothness loss."""
    n, c, h, w = x.shape
    nc = n * c
    hw = h * w
    hwp = ((hw + 127) // 128) * 128               # lane-pad H*W to multiple of 128

    x2 = x.reshape(nc, hw)                        # free (contiguous) reshape

    # Rows per block: ~1 MiB of f32-equivalent elements, multiple of 8.
    target_rows = max(8, ((1 << 18) // hwp) // 8 * 8)
    rows_cap = ((nc + 7) // 8) * 8
    r = min(target_rows, rows_cap)

    n_blocks = -(-nc // r)
    p = 2 if n_blocks >= 2 else 1                 # core-parallel split when worthwhile
    g = -(-n_blocks // p)
    rows_pad = p * g * r

    if rows_pad != nc or hwp != hw:
        # zero padding contributes 0 to the masked squared-difference sums
        x2 = jnp.pad(x2, ((0, rows_pad - nc), (0, hwp - hw)))

    # Precomputed 0/1 masks (applied to the left index of each pair).
    idx = np.arange(hwp)
    if w > 1:
        mw_np = ((idx < hw) & (idx % w != (w - 1))).astype(np.float32)
    else:
        mw_np = np.zeros(hwp, np.float32)
    mh_np = (idx < (hw - w)).astype(np.float32)
    mw = jnp.asarray(mw_np.reshape(1, hwp))
    mh = jnp.asarray(mh_np.reshape(1, hwp))

    kernel = _make_kernel(h, w, hwp)

    out = pl.pallas_call(
        kernel,
        out_shape=jax.ShapeDtypeStruct((p, 8, 128), jnp.float32),
        grid_spec=pltpu.PrefetchScalarGridSpec(
            num_scalar_prefetch=0,
            grid=(p, g),
            in_specs=[
                pl.BlockSpec((1, hwp), lambda pp, gg: (0, 0)),        # mw (resident)
                pl.BlockSpec((1, hwp), lambda pp, gg: (0, 0)),        # mh (resident)
                pl.BlockSpec((r, hwp), lambda pp, gg: (pp * g + gg, 0)),  # x rows
            ],
            out_specs=pl.BlockSpec((1, 8, 128), lambda pp, gg: (pp, 0, 0)),
        ),
        compiler_params=pltpu.CompilerParams(
            dimension_semantics=("parallel", "arbitrary"),
        ),
        cost_estimate=pl.CostEstimate(
            flops=8 * nc * hw,
            transcendentals=0,
            bytes_accessed=int(x2.size) * x2.dtype.itemsize + p * 8 * 128 * 4,
        ),
    )(mw, mh, x2)

    # Every element of a core's (8,128) block holds that core's partial sum.
    tv = jnp.sum(out[:, 0, 0])
    w_arr = jnp.full((1,), weight, dtype=jnp.float32)   # mirrors np.ones(1).fill(weight)
    return w_arr * tv


def _reference(x, weight=1.0):
    x = x.astype(jnp.float32)
    xd = x[:, :, :, :-1] - x[:, :, :, 1:]
    yd = x[:, :, :-1, :] - x[:, :, 1:, :]
    loss = jnp.sum(xd * xd) + jnp.sum(yd * yd)
    return jnp.full((1,), weight, dtype=jnp.float32) * loss


if __name__ == "__main__":
    key = jax.random.PRNGKey(0)
    x = jax.random.normal(key, (2, 4, 16, 16), dtype=jnp.float32)

    loss = jax.block_until_ready(self_smooth_loss2(x, weight=1.0))
    ref = jax.block_until_ready(_reference(x, weight=1.0))

    assert loss.shape == (1,) and loss.dtype == jnp.float32
    assert jnp.allclose(loss, ref, rtol=1e-4, atol=1e-4), (loss, ref)
    print("KERNEL_OK")
</pallas_src>

<mosaic_0001>
module attributes {stable_mosaic.version = 11 : i64} {
  func.func @kernel(%arg0: i32, %arg1: i32, %arg2: memref<1x256xf32, #tpu.memory_space<vmem>>, %arg3: memref<1x256xf32, #tpu.memory_space<vmem>>, %arg4: memref<8x256xf32, #tpu.memory_space<vmem>>, %arg5: memref<1x8x128xf32, #tpu.memory_space<vmem>>) attributes {dimension_semantics = [#tpu.dimension_semantics<parallel>, #tpu.dimension_semantics<arbitrary>], iteration_bounds = array<i64: 1, 1>, scalar_prefetch = 0 : i64, scratch_operands = 0 : i64, tpu.core_type = #tpu.core_type<tc>, window_params = [{pipeline_mode = #tpu.pipeline_mode<synchronous>, transform_indices = @transform_0, window_bounds = array<i64: 1, 256>}, {pipeline_mode = #tpu.pipeline_mode<synchronous>, transform_indices = @transform_1, window_bounds = array<i64: 1, 256>}, {transform_indices = @transform_2, window_bounds = array<i64: 8, 256>}, {transform_indices = @transform_3, window_bounds = array<i64: 1, 8, 128>}]} {
    %c0_i32 = arith.constant 0 : i32
    %0 = arith.cmpi eq, %arg1, %c0_i32 : i32
    %1 = arith.extui %0 : i1 to i32
    %c0_i32_0 = arith.constant 0 : i32
    %2 = arith.cmpi ne, %1, %c0_i32_0 : i32
    scf.if %2 {
      %cst_14 = arith.constant 0.000000e+00 : f32
      %34 = vector.broadcast %cst_14 : f32 to vector<1x8x128xf32>
      %c0_15 = arith.constant 0 : index
      %c0_16 = arith.constant 0 : index
      %c0_17 = arith.constant 0 : index
      %35 = vector.load %arg5[%c0_15, %c0_16, %c0_17] : memref<1x8x128xf32, #tpu.memory_space<vmem>>, vector<1x8x128xf32>
      tpu.vector_store %arg5[%c0_15, %c0_16, %c0_17], %34 {strides = array<i32>} : memref<1x8x128xf32, #tpu.memory_space<vmem>>, vector<1x8x128xf32>,
    } else {
    }
    %c0 = arith.constant 0 : index
    %c0_1 = arith.constant 0 : index
    %3 = vector.load %arg4[%c0, %c0_1] : memref<8x256xf32, #tpu.memory_space<vmem>>, vector<8x256xf32>
    %c0_2 = arith.constant 0 : index
    %c0_3 = arith.constant 0 : index
    %4 = vector.load %arg2[%c0_2, %c0_3] : memref<1x256xf32, #tpu.memory_space<vmem>>, vector<1x256xf32>
    %5 = vector.extract_strided_slice %3 {offsets = [0, 0], sizes = [8, 255], strides = [1, 1]} : vector<8x256xf32> to vector<8x255xf32>
    %6 = vector.extract_strided_slice %3 {offsets = [0, 1], sizes = [8, 255], strides = [1, 1]} : vector<8x256xf32> to vector<8x255xf32>
    %7 = arith.subf %5, %6 : vector<8x255xf32>
    %8 = vector.extract_strided_slice %4 {offsets = [0, 0], sizes = [1, 255], strides = [1, 1]} : vector<1x256xf32> to vector<1x255xf32>
    %9 = vector.broadcast %8 : vector<1x255xf32> to vector<8x255xf32>
    %10 = arith.mulf %7, %9 : vector<8x255xf32>
    %11 = arith.mulf %10, %10 : vector<8x255xf32>
    %12 = vector.shape_cast %11 : vector<8x255xf32> to vector<1x8x255xf32>
    %cst = arith.constant dense<0.000000e+00> : vector<1xf32>
    %13 = vector.multi_reduction <add>, %12, %cst [1, 2] : vector<1x8x255xf32> to vector<1xf32>
    %14 = vector.shape_cast %13 : vector<1xf32> to vector<1x1x1xf32>
    %15 = vector.extract %14[0, 0, 0] : f32 from vector<1x1x1xf32>
    %cst_4 = arith.constant 0.000000e+00 : f32
    %16 = arith.addf %cst_4, %15 : f32
    %c0_5 = arith.constant 0 : index
    %c0_6 = arith.constant 0 : index
    %17 = vector.load %arg3[%c0_5, %c0_6] : memref<1x256xf32, #tpu.memory_space<vmem>>, vector<1x256xf32>
    %18 = vector.extract_strided_slice %3 {offsets = [0, 0], sizes = [8, 240], strides = [1, 1]} : vector<8x256xf32> to vector<8x240xf32>
    %19 = vector.extract_strided_slice %3 {offsets = [0, 16], sizes = [8, 240], strides = [1, 1]} : vector<8x256xf32> to vector<8x240xf32>
    %20 = arith.subf %18, %19 : vector<8x240xf32>
    %21 = vector.extract_strided_slice %17 {offsets = [0, 0], sizes = [1, 240], strides = [1, 1]} : vector<1x256xf32> to vector<1x240xf32>
    %22 = vector.broadcast %21 : vector<1x240xf32> to vector<8x240xf32>
    %23 = arith.mulf %20, %22 : vector<8x240xf32>
    %24 = arith.mulf %23, %23 : vector<8x240xf32>
    %25 = vector.shape_cast %24 : vector<8x240xf32> to vector<1x8x240xf32>
    %cst_7 = arith.constant dense<0.000000e+00> : vector<1xf32>
    %26 = vector.multi_reduction <add>, %25, %cst_7 [1, 2] : vector<1x8x240xf32> to vector<1xf32>
    %27 = vector.shape_cast %26 : vector<1xf32> to vector<1x1x1xf32>
    %28 = vector.extract %27[0, 0, 0] : f32 from vector<1x1x1xf32>
    %29 = arith.addf %16, %28 : f32
    %c0_8 = arith.constant 0 : index
    %c0_9 = arith.constant 0 : index
    %c0_10 = arith.constant 0 : index
    %30 = vector.load %arg5[%c0_8, %c0_9, %c0_10] : memref<1x8x128xf32, #tpu.memory_space<vmem>>, vector<1x8x128xf32>
    %31 = vector.broadcast %29 : f32 to vector<1x8x128xf32>
    %32 = arith.addf %30, %31 : vector<1x8x128xf32>
    %c0_11 = arith.constant 0 : index
    %c0_12 = arith.constant 0 : index
    %c0_13 = arith.constant 0 : index
    %33 = vector.load %arg5[%c0_11, %c0_12, %c0_13] : memref<1x8x128xf32, #tpu.memory_space<vmem>>, vector<1x8x128xf32>
    tpu.vector_store %arg5[%c0_11, %c0_12, %c0_13], %32 {strides = array<i32>} : memref<1x8x128xf32, #tpu.memory_space<vmem>>, vector<1x8x128xf32>,
    return
  }
  func.func @transform_0(%arg0: i32, %arg1: i32) -> (i32, i32) {
    %c0_i32 = arith.constant 0 : i32
    %c0_i32_0 = arith.constant 0 : i32
    %c0_i32_1 = arith.constant 0 : i32
    return %c0_i32, %c0_i32_0 : i32, i32
  }
  func.func @transform_1(%arg0: i32, %arg1: i32) -> (i32, i32) {
    %c0_i32 = arith.constant 0 : i32
    %c0_i32_0 = arith.constant 0 : i32
    %c0_i32_1 = arith.constant 0 : i32
    return %c0_i32, %c0_i32_0 : i32, i32
  }
  func.func @transform_2(%arg0: i32, %arg1: i32) -> (i32, i32) {
    %c1_i32 = arith.constant 1 : i32
    %0 = arith.muli %arg0, %c1_i32 : i32
    %1 = arith.addi %0, %arg1 : i32
    %c0_i32 = arith.constant 0 : i32
    %c0_i32_0 = arith.constant 0 : i32
    return %1, %c0_i32 : i32, i32
  }
  func.func @transform_3(%arg0: i32, %arg1: i32) -> (i32, i32, i32) {
    %c0_i32 = arith.constant 0 : i32
    %c0_i32_0 = arith.constant 0 : i32
    %c0_i32_1 = arith.constant 0 : i32
    return %arg0, %c0_i32, %c0_i32_0 : i32, i32, i32
  }
}

</mosaic_0001>

<llo_original>
// kernel: tpu_custom_call.1
$region0: #{tpu_custom_call.1}
  #allocation0 [shape = 'u32[]', space=smem, size = 0x4, offset = 0x4, fixed_abs, tag = 'smem constant byte address 0x4 - core index']
  #allocation1 [shape = 'u32[144,128]{1,0:T(1,128)}', space=vmem, size = 0x12000, scoped, tag = 'internal scratch']
  %s0 = inlined_call_operand.hbm [shape: f32[1,256], index: 0, kind: input, shape index: {}]
  %s1 = inlined_call_operand.vmem [shape: f32[1,256], index: 1, kind: input, shape index: {}]
  %s2 = inlined_call_operand.hbm [shape: f32[8,256], index: 2, kind: input, shape index: {}]
  %s3 = inlined_call_operand.hbm [shape: f32[1,8,128], index: 3, kind: output, shape index: {}]
  %s4 = sld [smem:[#allocation0]]
  $region34: #{tpu_custom_call.1} parent=0
    _
  %s6 = ssub.s32 1, %s4
  %s7 = scalar_select 0, %s6, %s4
  $region1: #{tpu_custom_call.1} parent=0
    #allocation2 [shape = 'u8[1024]{0}', space=vmem, size = 0x400, scoped, tag = 'input window, operand 0, single buffered']
    #allocation3 [shape = 's32[1]{0}', space=sflag, size = 0x4, scoped, tag = 'scoped memory for tpu_custom_call.1']
    #allocation4 [shape = 's32[1]{0}', space=sflag, size = 0x4, scoped, tag = 'scoped memory for tpu_custom_call.1']
    #allocation5 [shape = 'u8[8192]{0}', space=vmem, size = 0x2000, scoped, tag = 'input window, operand 2, single buffered']
    #allocation6 [shape = 's32[1]{0}', space=sflag, size = 0x4, scoped, tag = 'scoped memory for tpu_custom_call.1']
    #allocation7 [shape = 'u8[4096]{0}', space=vmem, size = 0x1000, scoped, tag = 'output window, operand 0, single buffered']
    %8 = vsyncpa [#allocation3], 0
    %9 = vsyncpa [#allocation6], 0
    %10 = vsyncpa [#allocation4], 0
    // Predicated region
    $region2: #{tpu_custom_call.1} parent=1 // pred_check
      _
    $region3: #{tpu_custom_call.1} parent=1 // pred_check_branch
      %12 = sbr.rel (0) target = $region5
    $region4: #{tpu_custom_call.1} parent=1 // pred_region
      %s14 = ssub.s32 32, 32
      %15 = vsyncadd [#allocation3], %s14
      %s17 = sshll.u32 [#allocation2], 4
      %s18 = int_to_ptr.vmem [resolvable:$true] %s17
      %20 = dma.hbm_to_vmem [thread:$0]  %s0, 32, %s18, [#allocation3]
    $region5: #{tpu_custom_call.1} parent=1 // pred_fallthru
      _
    // Predicated region
    $region6: #{tpu_custom_call.1} parent=1 // pred_check
      _
    $region7: #{tpu_custom_call.1} parent=1 // pred_check_branch
      %22 = sbr.rel (0) target = $region9
    $region8: #{tpu_custom_call.1} parent=1 // pred_region
      _
    $region9: #{tpu_custom_call.1} parent=1 // pred_fallthru
      _
    // Predicated region
    $region10: #{tpu_custom_call.1} parent=1 // pred_check
      _
    $region11: #{tpu_custom_call.1} parent=1 // pred_check_branch
      %24 = sbr.rel (0) target = $region13
    $region12: #{tpu_custom_call.1} parent=1 // pred_region
      %s25 = sadd.s32 0, 0
      %s27 = ssub.s32 256, 256
      %28 = vsyncadd [#allocation6], %s27
      %s29 = smul.addr %s25, 2
      %s30 = smul.addr %s29, 128
      %s31 = scalar_lea.hbm %s2, %s30
      %s33 = sshll.u32 [#allocation5], 4
      %s34 = int_to_ptr.vmem [resolvable:$true] %s33
      %36 = dma.hbm_to_vmem [thread:$0]  %s31, 256, %s34, [#allocation6]
    $region13: #{tpu_custom_call.1} parent=1 // pred_fallthru
      _
    // Predicated region
    $region14: #{tpu_custom_call.1} parent=1 // pred_check
      _
    $region15: #{tpu_custom_call.1} parent=1 // pred_check_branch
      %38 = sbr.rel (0) target = $region17
    $region16: #{tpu_custom_call.1} parent=1 // pred_region
      %39 = dma.done [#allocation3], 32
    $region17: #{tpu_custom_call.1} parent=1 // pred_fallthru
      _
    // Predicated region
    $region18: #{tpu_custom_call.1} parent=1 // pred_check
      _
    $region19: #{tpu_custom_call.1} parent=1 // pred_check_branch
      %41 = sbr.rel (0) target = $region21
    $region20: #{tpu_custom_call.1} parent=1 // pred_region
      %42 = dma.done [#allocation6], 256
    $region21: #{tpu_custom_call.1} parent=1 // pred_fallthru
      _
    %s43 = sadd.s32 0, 0
    %p44 = scmp.eq.s32.totalorder 0, 0
    // Predicated region
    $region22: #{tpu_custom_call.1} parent=1 // pred_check
      %p45 = pneg %p44
    $region23: #{tpu_custom_call.1} parent=1 // pred_check_branch
      %47 = sbr.rel (%p45) target = $region25
    $region24: #{tpu_custom_call.1} parent=1 // pred_region
      %48 = vst [vmem:[#allocation7] sm:$0xff] 0.0
    $region25: #{tpu_custom_call.1} parent=1 // pred_fallthru
      _
    %v49 = vld [vmem:[#allocation5] sm:$0xff]
    %v50 = vld [vmem:[#allocation5 + $0x8] sm:$0xff]
    %v51 = vld [vmem:[#allocation2] sm:$0x3]
    %54 = vrot.lane.b32.xlu0 %v49, 127
    %v55 = vpop.permute.xlu0 %54
    %56 = vrot.lane.b32.xlu0 %v50, 127
    %v57 = vpop.permute.xlu0 %56
    %vm58 = vcmask 1039360
    %v59 = vsel %vm58, %v55, %v57
    %v62 = vsub.f32 %v49, %v59
    %v63 = vsub.f32 %v50, %v57
    %v65 = vlaneseq
    %v66 = vshrl.u32 %v65, 7
    %v67 = vsub.s32 0, %v66
    %v68 = vrot.slane %v51, %v67
    %v69 = vlaneseq
    %v70 = vshrl.u32 %v69, 7
    %v71 = vsub.s32 1, %v70
    %v72 = vrot.slane %v51, %v71
    %v75 = vmul.f32 %v62, %v68
    %v76 = vmul.f32 %v63, %v72
    %v77 = vmul.f32 %v75, %v75
    %v78 = vmul.f32 %v76, %v76
    %v79 = vsel %vm58, %v78, 0.0
    %v80 = vadd.f32 %v77, %v79
    %81 = vadd.xlane.f32.xlu0 %v80
    %v82 = vpop.xlane.xlu0 %81
    %v83 = vrot.slane %v82, 4
    %v84 = vadd.f32 %v82, %v83
    %v85 = vrot.slane %v84, 2
    %v86 = vadd.f32 %v84, %v85
    %v87 = vrot.slane %v86, 1
    %v88 = vadd.f32 %v86, %v87
    %s89 = vtos %v88
    %s90 = sadd.f32 %s89, 0.0
    %v91 = vld [vmem:[%s1] sm:$0x3]
    %92 = vrot.lane.b32.xlu0 %v49, 112
    %v93 = vpop.permute.xlu0 %92
    %94 = vrot.lane.b32.xlu0 %v50, 112
    %v95 = vpop.permute.xlu0 %94
    %vm96 = vcmask 916480
    %v97 = vsel %vm96, %v93, %v95
    %v100 = vsub.f32 %v49, %v97
    %v101 = vsub.f32 %v50, %v95
    %v103 = vlaneseq
    %v104 = vshrl.u32 %v103, 7
    %v105 = vsub.s32 0, %v104
    %v106 = vrot.slane %v91, %v105
    %v107 = vlaneseq
    %v108 = vshrl.u32 %v107, 7
    %v109 = vsub.s32 1, %v108
    %v110 = vrot.slane %v91, %v109
    %v113 = vmul.f32 %v100, %v106
    %v114 = vmul.f32 %v101, %v110
    %v115 = vmul.f32 %v113, %v113
    %v116 = vmul.f32 %v114, %v114
    %v117 = vsel %vm96, %v116, 0.0
    %v118 = vadd.f32 %v115, %v117
    %119 = vadd.xlane.f32.xlu0 %v118
    %v120 = vpop.xlane.xlu0 %119
    %v121 = vrot.slane %v120, 4
    %v122 = vadd.f32 %v120, %v121
    %v123 = vrot.slane %v122, 2
    %v124 = vadd.f32 %v122, %v123
    %v125 = vrot.slane %v124, 1
    %v126 = vadd.f32 %v124, %v125
    %s127 = vtos %v126
    %s128 = sadd.f32 %s90, %s127
    %v129 = vld [vmem:[#allocation7] sm:$0xff]
    %v130 = vstv %s128
    %v131 = vadd.f32 %v129, %v130
    %132 = vst [vmem:[#allocation7] sm:$0xff] %v131
    // Predicated region
    $region26: #{tpu_custom_call.1} parent=1 // pred_check
      _
    $region27: #{tpu_custom_call.1} parent=1 // pred_check_branch
      %134 = sbr.rel (0) target = $region29
    $region28: #{tpu_custom_call.1} parent=1 // pred_region
      %s136 = ssub.s32 128, 128
      %137 = vsyncadd [#allocation4], %s136
      %s139 = sshll.u32 [#allocation7], 4
      %s140 = int_to_ptr.vmem [resolvable:$true] %s139
      %142 = dma.vmem_to_hbm [thread:$0]  %s140, 128, %s3, [#allocation4]
    $region29: #{tpu_custom_call.1} parent=1 // pred_fallthru
      _
    // Predicated region
    $region30: #{tpu_custom_call.1} parent=1 // pred_check
      _
    $region31: #{tpu_custom_call.1} parent=1 // pred_check_branch
      %144 = sbr.rel (0) target = $region33
    $region32: #{tpu_custom_call.1} parent=1 // pred_region
      %145 = dma.done [#allocation4], 128
    $region33: #{tpu_custom_call.1} parent=1 // pred_fallthru
      _
    %146 = vsyncpa [#allocation3], 1
    %147 = vsyncpa [#allocation6], 1
    %148 = vsyncpa [#allocation4], 1

</llo_original>
